<compile_context>
chip_gen: v6e
topology: v6e:2x2x1
jax: 0.10.0
libtpu: 0.0.40
codegen_flags: <defaults>
</compile_context>

<pallas_src>
import functools
import math

import jax
import jax.numpy as jnp
from jax import lax
from jax.experimental import pallas as pl
from jax.experimental.pallas import tpu as pltpu


# ---------------------------------------------------------------------------
# helpers
# ---------------------------------------------------------------------------

def _round_up(x, m):
    return ((x + m - 1) // m) * m


def _pad2d(x, rows, cols):
    r, c = x.shape
    if r == rows and c == cols:
        return x
    return jnp.pad(x, ((0, rows - r), (0, cols - c)))


def _pad_last(x, dp):
    d = x.shape[-1]
    if d == dp:
        return x
    pad = [(0, 0)] * (x.ndim - 1) + [(0, dp - d)]
    return jnp.pad(x, pad)


def _cparams(*sem):
    # Conservative scoped-VMEM bump that is safe on v5e/v6e (128 MiB) and
    # v7x (64 MiB physical).
    return pltpu.CompilerParams(dimension_semantics=sem,
                                vmem_limit_bytes=48 * 1024 * 1024)


def _masked_layernorm(y, d_true, g, beta):
    # LayerNorm over the true feature width d_true; padded lanes are masked out.
    mask = (lax.broadcasted_iota(jnp.int32, y.shape, y.ndim - 1) < d_true
            ).astype(jnp.float32)
    inv_d = 1.0 / float(d_true)
    mu = jnp.sum(y * mask, axis=-1, keepdims=True) * inv_d
    diff = (y - mu) * mask
    var = jnp.sum(diff * diff, axis=-1, keepdims=True) * inv_d
    return diff * lax.rsqrt(var + 1e-5) * g + beta   # PyTorch LayerNorm eps


# ---------------------------------------------------------------------------
# Pallas kernels
# ---------------------------------------------------------------------------

def _matmul_bias_kernel(relu, x_ref, w_ref, b_ref, o_ref, acc_ref):
    """Tiled matmul with K-accumulation: o = x @ w + b (optional ReLU).

    x/w are bf16, accumulate f32, output bf16.
    """
    k = pl.program_id(2)

    @pl.when(k == 0)
    def _():
        acc_ref[...] = jnp.zeros_like(acc_ref)

    acc_ref[...] += jnp.dot(x_ref[...], w_ref[...],
                            preferred_element_type=jnp.float32)

    @pl.when(k == pl.num_programs(2) - 1)
    def _():
        y = acc_ref[...] + b_ref[...]
        if relu:
            y = jnp.maximum(y, 0.0)
        o_ref[...] = y.astype(o_ref.dtype)


def _matmul_add_ln_kernel(d_true, x_ref, w_ref, b_ref, r_ref, g_ref, beta_ref,
                          o_ref):
    """o = LayerNorm(residual + x @ w + b)  (K = full, grid over rows)."""
    y = jnp.dot(x_ref[...], w_ref[...], preferred_element_type=jnp.float32)
    y = y + b_ref[...] + r_ref[...].astype(jnp.float32)
    o_ref[...] = _masked_layernorm(y, d_true, g_ref[...],
                                   beta_ref[...]).astype(o_ref.dtype)


def _ffn_add_ln_kernel(d_true, x_ref, w1_ref, b1_ref, w2_ref, b2_ref, g_ref,
                       beta_ref, o_ref):
    """o = LayerNorm(x + relu(x @ w1 + b1) @ w2 + b2)  (fused FFN)."""
    x = x_ref[...]
    h = jnp.dot(x, w1_ref[...], preferred_element_type=jnp.float32) + b1_ref[...]
    h = jnp.maximum(h, 0.0)
    y = jnp.dot(h.astype(jnp.bfloat16), w2_ref[...],
                preferred_element_type=jnp.float32)
    y = y + b2_ref[...] + x.astype(jnp.float32)
    o_ref[...] = _masked_layernorm(y, d_true, g_ref[...],
                                   beta_ref[...]).astype(o_ref.dtype)


def _attention_head_kernel(q_ref, k_ref, v_ref, o_ref):
    """One (batch, head) attention step; head slab is 128-lane aligned.

    Scale 1/sqrt(dk) is folded into the Q projection weights.  Padded lanes of
    q/k/v are exact zeros (zero weight columns + zero bias), so contracting
    over the full dk_pad width is exact.
    """
    q = q_ref[0]                     # [Sq, dkp] bf16
    k = k_ref[0]                     # [Sk, dkp] bf16
    v = v_ref[0]                     # [Sk, dkp] bf16
    s = lax.dot_general(q, k, (((1,), (1,)), ((), ())),
                        preferred_element_type=jnp.float32)   # [Sq, Sk]
    m = jnp.max(s, axis=-1, keepdims=True)
    e = jnp.exp(s - m)
    p = e * pl.reciprocal(jnp.sum(e, axis=-1, keepdims=True), approx=True)
    out = jnp.dot(p.astype(jnp.bfloat16), v, preferred_element_type=jnp.float32)
    o_ref[0] = out.astype(o_ref.dtype)          # lane-dense [Sq, dkp] store


def _proj_softmax_t_kernel(y_ref, w_ref, b_ref, o_ref):
    """Fused: logits = y @ w + b; softmax over the sequence axis (dim=1 of the
    original [B, St, V] tensor); write already transposed to [B, V, St].

    Exact divide for the final probabilities (no approx reciprocal).
    """
    logits = jnp.dot(y_ref[0], w_ref[...],
                     preferred_element_type=jnp.float32) + b_ref[...]   # [St, tv]
    m = jnp.max(logits, axis=0, keepdims=True)
    e = jnp.exp(logits - m)
    p = e / jnp.sum(e, axis=0, keepdims=True)
    o_ref[0] = p.T                                                      # [tv, St]


# ---------------------------------------------------------------------------
# pallas_call wrappers
# ---------------------------------------------------------------------------

def pallas_matmul_bias(x, w, b, relu=False, tm=256, tn=256, tk=512):
    """Tiled o = x @ w + b.  x:[M,K] bf16, w:[K,N] bf16, b:[N] f32 -> bf16."""
    m, k_dim = x.shape
    n = w.shape[1]
    tm = min(tm, _round_up(m, 8))
    tn = min(tn, _round_up(n, 128))
    tk = min(tk, _round_up(k_dim, 128))
    mp, np_, kp = _round_up(m, tm), _round_up(n, tn), _round_up(k_dim, tk)

    xp = _pad2d(x.astype(jnp.bfloat16), mp, kp)
    wp = _pad2d(w.astype(jnp.bfloat16), kp, np_)
    bp = _pad2d(b.astype(jnp.float32).reshape(1, n), 1, np_)

    # TODO(synk): sweep pipeline_mode=pl.Buffered(3) on x/w specs for very large
    # K (e.g. vocab projection) if DMA waits show up in the bundle dump.
    out = pl.pallas_call(
        functools.partial(_matmul_bias_kernel, relu),
        out_shape=jax.ShapeDtypeStruct((mp, np_), jnp.bfloat16),
        grid=(mp // tm, np_ // tn, kp // tk),
        in_specs=[
            pl.BlockSpec((tm, tk), lambda i, j, kk: (i, kk)),
            pl.BlockSpec((tk, tn), lambda i, j, kk: (kk, j)),
            pl.BlockSpec((1, tn), lambda i, j, kk: (0, j)),
        ],
        out_specs=pl.BlockSpec((tm, tn), lambda i, j, kk: (i, j)),
        scratch_shapes=[pltpu.VMEM((tm, tn), jnp.float32)],
        compiler_params=_cparams("parallel", "parallel", "arbitrary"),
    )(xp, wp, bp)
    return out[:m, :n]


def pallas_matmul_add_ln(x, res, w, b, g, beta, tm=256):
    """o = LN(res + x @ w + b); grid over rows, full feature dim per block."""
    m, k_dim = x.shape
    n = w.shape[1]
    tm = min(tm, _round_up(m, 8))
    mp = _round_up(m, tm)
    kp = _round_up(k_dim, 128)
    np_ = _round_up(n, 128)

    xp = _pad2d(x.astype(jnp.bfloat16), mp, kp)
    rp = _pad2d(res.astype(jnp.bfloat16), mp, np_)
    wp = _pad2d(w.astype(jnp.bfloat16), kp, np_)
    bp = _pad2d(b.astype(jnp.float32).reshape(1, n), 1, np_)
    gp = _pad2d(g.reshape(1, n), 1, np_)
    betap = _pad2d(beta.reshape(1, n), 1, np_)

    out = pl.pallas_call(
        functools.partial(_matmul_add_ln_kernel, n),
        out_shape=jax.ShapeDtypeStruct((mp, np_), jnp.bfloat16),
        grid=(mp // tm,),
        in_specs=[
            pl.BlockSpec((tm, kp), lambda i: (i, 0)),
            pl.BlockSpec((kp, np_), lambda i: (0, 0)),
            pl.BlockSpec((1, np_), lambda i: (0, 0)),
            pl.BlockSpec((tm, np_), lambda i: (i, 0)),
            pl.BlockSpec((1, np_), lambda i: (0, 0)),
            pl.BlockSpec((1, np_), lambda i: (0, 0)),
        ],
        out_specs=pl.BlockSpec((tm, np_), lambda i: (i, 0)),
        compiler_params=_cparams("parallel"),
    )(xp, wp, bp, rp, gp, betap)
    return out[:m, :n]


def pallas_ffn_add_ln(x, w1, b1, w2, b2, g, beta, tm=256):
    """o = LN(x + relu(x @ w1 + b1) @ w2 + b2); fused FFN + residual + LN."""
    m, d = x.shape
    hidden = w1.shape[1]
    tm = min(tm, _round_up(m, 8))
    mp = _round_up(m, tm)
    dp = _round_up(d, 128)
    hp = _round_up(hidden, 128)

    xp = _pad2d(x.astype(jnp.bfloat16), mp, dp)
    w1p = _pad2d(w1.astype(jnp.bfloat16), dp, hp)
    b1p = _pad2d(b1.astype(jnp.float32).reshape(1, hidden), 1, hp)
    w2p = _pad2d(w2.astype(jnp.bfloat16), hp, dp)
    b2p = _pad2d(b2.astype(jnp.float32).reshape(1, d), 1, dp)
    gp = _pad2d(g.reshape(1, d), 1, dp)
    betap = _pad2d(beta.reshape(1, d), 1, dp)

    # TODO(synk): for production D (>=1024, 4x hidden) on v7x, tile the hidden
    # dim with a K-accumulating second matmul instead of full residency.
    out = pl.pallas_call(
        functools.partial(_ffn_add_ln_kernel, d),
        out_shape=jax.ShapeDtypeStruct((mp, dp), jnp.bfloat16),
        grid=(mp // tm,),
        in_specs=[
            pl.BlockSpec((tm, dp), lambda i: (i, 0)),
            pl.BlockSpec((dp, hp), lambda i: (0, 0)),
            pl.BlockSpec((1, hp), lambda i: (0, 0)),
            pl.BlockSpec((hp, dp), lambda i: (0, 0)),
            pl.BlockSpec((1, dp), lambda i: (0, 0)),
            pl.BlockSpec((1, dp), lambda i: (0, 0)),
            pl.BlockSpec((1, dp), lambda i: (0, 0)),
        ],
        out_specs=pl.BlockSpec((tm, dp), lambda i: (i, 0)),
        compiler_params=_cparams("parallel"),
    )(xp, w1p, b1p, w2p, b2p, gp, betap)
    return out[:m, :d]


def pallas_self_attention(qkv, num_heads, dkp):
    """qkv: [B, S, 3*H*dkp] bf16 (head-padded layout).  Output [B, S, H*dkp]."""
    b, s, _ = qkv.shape
    dh = num_heads * dkp
    return pl.pallas_call(
        _attention_head_kernel,
        out_shape=jax.ShapeDtypeStruct((b, s, dh), jnp.bfloat16),
        grid=(b, num_heads),
        in_specs=[
            pl.BlockSpec((1, s, dkp), lambda bi, h: (bi, 0, h)),
            pl.BlockSpec((1, s, dkp), lambda bi, h: (bi, 0, num_heads + h)),
            pl.BlockSpec((1, s, dkp), lambda bi, h: (bi, 0, 2 * num_heads + h)),
        ],
        out_specs=pl.BlockSpec((1, s, dkp), lambda bi, h: (bi, 0, h)),
        compiler_params=_cparams("parallel", "parallel"),
    )(qkv, qkv, qkv)


def pallas_cross_attention(q, kv, num_heads, dkp):
    """q: [B, Sq, H*dkp]; kv: [B, Sk, 2*H*dkp].  Output [B, Sq, H*dkp]."""
    b, sq, _ = q.shape
    sk = kv.shape[1]
    dh = num_heads * dkp
    return pl.pallas_call(
        _attention_head_kernel,
        out_shape=jax.ShapeDtypeStruct((b, sq, dh), jnp.bfloat16),
        grid=(b, num_heads),
        in_specs=[
            pl.BlockSpec((1, sq, dkp), lambda bi, h: (bi, 0, h)),
            pl.BlockSpec((1, sk, dkp), lambda bi, h: (bi, 0, h)),
            pl.BlockSpec((1, sk, dkp), lambda bi, h: (bi, 0, num_heads + h)),
        ],
        out_specs=pl.BlockSpec((1, sq, dkp), lambda bi, h: (bi, 0, h)),
        compiler_params=_cparams("parallel", "parallel"),
    )(q, kv, kv)


def pallas_proj_softmax_transpose(y, w, bias, tv=512):
    """Fused output projection + Softmax(dim=1) + permute(0,2,1).

    y: [B, St, D] bf16, w: [D, V] bf16, bias: [V] f32 -> [B, V, St] f32.
    """
    b, st, d = y.shape
    v = w.shape[1]
    dp = _round_up(d, 128)
    tv = min(tv, _round_up(v, 128))
    vp = _round_up(v, tv)

    yp = _pad_last(y.astype(jnp.bfloat16), dp)
    wp = _pad2d(w.astype(jnp.bfloat16), dp, vp)
    bp = _pad2d(bias.astype(jnp.float32).reshape(1, v), 1, vp)

    out = pl.pallas_call(
        _proj_softmax_t_kernel,
        out_shape=jax.ShapeDtypeStruct((b, vp, st), jnp.float32),
        grid=(b, vp // tv),
        in_specs=[
            pl.BlockSpec((1, st, dp), lambda bi, j: (bi, 0, 0)),
            pl.BlockSpec((dp, tv), lambda bi, j: (0, j)),
            pl.BlockSpec((1, tv), lambda bi, j: (0, j)),
        ],
        out_specs=pl.BlockSpec((1, tv, st), lambda bi, j: (bi, j, 0)),
        compiler_params=_cparams("parallel", "parallel"),
    )(yp, wp, bp)
    return out[:, :v, :]


# ---------------------------------------------------------------------------
# Model building blocks (glue in plain JAX, compute in Pallas)
# ---------------------------------------------------------------------------

def mha_block(xq, xkv, p, num_heads, dkp, self_attn):
    """QKV projection (head-padded, fused) + head-batched attention.

    Returns the pre-output-projection attention output [B, Sq, H*dkp] bf16.
    """
    b, sq, d = xq.shape
    dh = num_heads * dkp
    if self_attn:
        qkv = pallas_matmul_bias(xq.reshape(b * sq, d), p['wqkv'], p['bqkv'])
        return pallas_self_attention(qkv.reshape(b, sq, 3 * dh), num_heads, dkp)
    sk = xkv.shape[1]
    q = pallas_matmul_bias(xq.reshape(b * sq, d), p['wq'], p['bq'])
    kv = pallas_matmul_bias(xkv.reshape(b * sk, d), p['wkv'], p['bkv'])
    return pallas_cross_attention(q.reshape(b, sq, dh),
                                  kv.reshape(b, sk, 2 * dh), num_heads, dkp)


def encoder_layer(x, p, num_heads, dkp):
    b, s, d = x.shape
    attn = mha_block(x, x, p['attn'], num_heads, dkp, self_attn=True)
    h = pallas_matmul_add_ln(attn.reshape(b * s, num_heads * dkp),
                             x.reshape(b * s, d),
                             p['attn']['wo'], p['attn']['bo'],
                             p['ln1_g'], p['ln1_b'])
    out = pallas_ffn_add_ln(h, p['w1'], p['b1'], p['w2'], p['b2'],
                            p['ln2_g'], p['ln2_b'])
    return out.reshape(b, s, d)


def decoder_layer(y, enc_out, p, num_heads, dkp):
    b, s, d = y.shape
    dh = num_heads * dkp
    sa = mha_block(y, y, p['self_attn'], num_heads, dkp, self_attn=True)
    h1 = pallas_matmul_add_ln(sa.reshape(b * s, dh), y.reshape(b * s, d),
                              p['self_attn']['wo'], p['self_attn']['bo'],
                              p['ln1_g'], p['ln1_b'])
    ca = mha_block(h1.reshape(b, s, d), enc_out, p['cross_attn'], num_heads,
                   dkp, self_attn=False)
    h2 = pallas_matmul_add_ln(ca.reshape(b * s, dh), h1,
                              p['cross_attn']['wo'], p['cross_attn']['bo'],
                              p['ln2_g'], p['ln2_b'])
    out = pallas_ffn_add_ln(h2, p['w1'], p['b1'], p['w2'], p['b2'],
                            p['ln3_g'], p['ln3_b'])
    return out.reshape(b, s, d)


def sinusoidal_pe(max_len, d):
    pos = jnp.arange(max_len, dtype=jnp.float32)[:, None]
    idx = jnp.arange(d)
    rates = jnp.power(10000.0, -(2.0 * jnp.floor(idx.astype(jnp.float32) / 2.0)) / d)
    angles = pos * rates[None, :]
    return jnp.where((idx % 2 == 0)[None, :], jnp.sin(angles), jnp.cos(angles))


# ---------------------------------------------------------------------------
# Deterministic parameter initialization (same logical shapes as nn.Module,
# re-packed to the head-padded / fused layouts the kernels consume)
# ---------------------------------------------------------------------------

def init_linear(key, fan_in, fan_out):
    k1, k2 = jax.random.split(key)
    bound = 1.0 / math.sqrt(fan_in)
    w = jax.random.uniform(k1, (fan_in, fan_out), jnp.float32, -bound, bound)
    b = jax.random.uniform(k2, (fan_out,), jnp.float32, -bound, bound)
    return w, b


def _pack_head_cols(w, b, num_heads, dk, dkp, scale=1.0):
    """[D, H*dk] -> [D, H*dkp] (zero-padded per head slab); same for bias."""
    d = w.shape[0]
    wr = (w.reshape(d, num_heads, dk) * scale)
    wr = jnp.pad(wr, ((0, 0), (0, 0), (0, dkp - dk)))
    br = (b.reshape(num_heads, dk) * scale)
    br = jnp.pad(br, ((0, 0), (0, dkp - dk)))
    return wr.reshape(d, num_heads * dkp), br.reshape(num_heads * dkp)


def _pack_head_rows(w, num_heads, dk, dkp):
    """[H*dk, D] -> [H*dkp, D] with zero rows in the per-head pad positions."""
    d = w.shape[1]
    wr = w.reshape(num_heads, dk, d)
    wr = jnp.pad(wr, ((0, 0), (0, dkp - dk), (0, 0)))
    return wr.reshape(num_heads * dkp, d)


def init_mha(key, d, num_heads, dkp, mode):
    dk = d // num_heads
    scale = 1.0 / math.sqrt(dk)       # folded into Q projection weights
    ks = jax.random.split(key, 4)
    wq, bq = init_linear(ks[0], d, d)
    wk, bk = init_linear(ks[1], d, d)
    wv, bv = init_linear(ks[2], d, d)
    wo, bo = init_linear(ks[3], d, d)
    wq_p, bq_p = _pack_head_cols(wq, bq, num_heads, dk, dkp, scale)
    wk_p, bk_p = _pack_head_cols(wk, bk, num_heads, dk, dkp)
    wv_p, bv_p = _pack_head_cols(wv, bv, num_heads, dk, dkp)
    p = {'wo': _pack_head_rows(wo, num_heads, dk, dkp).astype(jnp.bfloat16),
         'bo': bo}
    if mode == 'self':
        p['wqkv'] = jnp.concatenate([wq_p, wk_p, wv_p], axis=1).astype(jnp.bfloat16)
        p['bqkv'] = jnp.concatenate([bq_p, bk_p, bv_p])
    else:   # cross-attention: separate Q (from decoder) and fused KV (encoder)
        p['wq'], p['bq'] = wq_p.astype(jnp.bfloat16), bq_p
        p['wkv'] = jnp.concatenate([wk_p, wv_p], axis=1).astype(jnp.bfloat16)
        p['bkv'] = jnp.concatenate([bk_p, bv_p])
    return p


def init_enc_layer(key, d, num_heads, dkp):
    ks = jax.random.split(key, 3)
    p = {'attn': init_mha(ks[0], d, num_heads, dkp, 'self')}
    # TODO(synk): fastNLP's encoder FFN width is not shown; use D -> D -> D.
    w1, b1 = init_linear(ks[1], d, d)
    w2, b2 = init_linear(ks[2], d, d)
    p['w1'], p['b1'] = w1.astype(jnp.bfloat16), b1
    p['w2'], p['b2'] = w2.astype(jnp.bfloat16), b2
    for n in ('ln1', 'ln2'):
        p[n + '_g'] = jnp.ones((d,), jnp.float32)
        p[n + '_b'] = jnp.zeros((d,), jnp.float32)
    return p


def init_dec_layer(key, d, num_heads, dkp):
    ks = jax.random.split(key, 4)
    p = {'self_attn': init_mha(ks[0], d, num_heads, dkp, 'self'),
         'cross_attn': init_mha(ks[1], d, num_heads, dkp, 'cross')}
    w1, b1 = init_linear(ks[2], d, d)
    w2, b2 = init_linear(ks[3], d, d)
    p['w1'], p['b1'] = w1.astype(jnp.bfloat16), b1
    p['w2'], p['b2'] = w2.astype(jnp.bfloat16), b2
    for n in ('ln1', 'ln2', 'ln3'):
        p[n + '_g'] = jnp.ones((d,), jnp.float32)
        p[n + '_b'] = jnp.zeros((d,), jnp.float32)
    return p


def init_transformer(key, src_vocab, src_max_len, tgt_vocab, tgt_max_len,
                     num_layers, d, num_heads):
    dk = d // num_heads
    dkp = _round_up(dk, 128)
    ks = jax.random.split(key, 3 + 2 * num_layers)
    params = {'dkp': dkp}
    src_emb = 0.02 * jax.random.normal(ks[0], (src_vocab + 1, d), jnp.float32)
    params['src_emb'] = src_emb.at[0].set(0.0)      # padding_idx=0
    tgt_emb = 0.02 * jax.random.normal(ks[1], (tgt_vocab + 1, d), jnp.float32)
    params['tgt_emb'] = tgt_emb.at[0].set(0.0)      # padding_idx=0
    params['src_pe'] = sinusoidal_pe(src_max_len, d)
    params['tgt_pe'] = sinusoidal_pe(tgt_max_len, d)
    params['enc'] = [init_enc_layer(ks[2 + i], d, num_heads, dkp)
                     for i in range(num_layers)]
    params['dec'] = [init_dec_layer(ks[2 + num_layers + i], d, num_heads, dkp)
                     for i in range(num_layers)]
    out_w, out_b = init_linear(ks[2 + 2 * num_layers], d, tgt_vocab)
    params['out_w'], params['out_b'] = out_w.astype(jnp.bfloat16), out_b
    return params


# ---------------------------------------------------------------------------
# Full forward pass
# ---------------------------------------------------------------------------

def transformer_forward(params, word_seq, translated_seq, num_heads):
    b, ss = word_seq.shape
    st = translated_seq.shape[1]
    dkp = params['dkp']

    # Embedding lookups + positional encodings (glue; gather stays in JAX).
    x = jnp.take(params['src_emb'], word_seq, axis=0) + params['src_pe'][None, :ss, :]
    y = jnp.take(params['tgt_emb'], translated_seq, axis=0) + params['tgt_pe'][None, :st, :]
    # nn.Dropout -> identity (eval-mode deterministic forward).
    x = x.astype(jnp.bfloat16)
    y = y.astype(jnp.bfloat16)

    for p in params['enc']:
        x = encoder_layer(x, p, num_heads, dkp)
    for p in params['dec']:
        y = decoder_layer(y, x, p, num_heads, dkp)

    # Fused: output projection + Softmax(dim=1) + permute(0, 2, 1).
    pred = pallas_proj_softmax_transpose(y, params['out_w'], params['out_b'])
    return {'pred': pred}


# ---------------------------------------------------------------------------

if __name__ == "__main__":
    B = 2
    SRC_VOCAB, TGT_VOCAB = 20, 12
    SRC_MAX_LEN = TGT_MAX_LEN = 8
    NUM_LAYERS, MODEL_DIM, NUM_HEADS = 2, 32, 4

    key = jax.random.PRNGKey(0)
    k_param, k_src, k_tgt = jax.random.split(key, 3)

    params = init_transformer(k_param, SRC_VOCAB, SRC_MAX_LEN,
                              TGT_VOCAB, TGT_MAX_LEN, NUM_LAYERS, MODEL_DIM,
                              NUM_HEADS)
    word_seq = jax.random.randint(k_src, (B, SRC_MAX_LEN), 1, SRC_VOCAB + 1,
                                  dtype=jnp.int32)
    translated_seq = jax.random.randint(k_tgt, (B, TGT_MAX_LEN), 1,
                                        TGT_VOCAB + 1, dtype=jnp.int32)

    out = transformer_forward(params, word_seq, translated_seq, NUM_HEADS)
    pred = jax.block_until_ready(out['pred'])

    assert pred.shape == (B, TGT_VOCAB, TGT_MAX_LEN), pred.shape
    assert bool(jnp.all(jnp.isfinite(pred)))
    print("KERNEL_OK")
</pallas_src>

<mosaic_0001>
module attributes {stable_mosaic.version = 11 : i64} {
  func.func @_matmul_bias_kernel(%arg0: i32, %arg1: i32, %arg2: i32, %arg3: memref<16x128xbf16, #tpu.memory_space<vmem>>, %arg4: memref<128x256xbf16, #tpu.memory_space<vmem>>, %arg5: memref<1x256xf32, #tpu.memory_space<vmem>>, %arg6: memref<16x256xbf16, #tpu.memory_space<vmem>>, %arg7: memref<16x256xf32, #tpu.memory_space<vmem>>) attributes {dimension_semantics = [#tpu.dimension_semantics<parallel>, #tpu.dimension_semantics<parallel>, #tpu.dimension_semantics<arbitrary>], iteration_bounds = array<i64: 1, 6, 1>, scalar_prefetch = 0 : i64, scratch_operands = 1 : i64, tpu.core_type = #tpu.core_type<tc>, window_params = [{transform_indices = @transform_0, window_bounds = array<i64: 16, 128>}, {transform_indices = @transform_1, window_bounds = array<i64: 128, 256>}, {transform_indices = @transform_2, window_bounds = array<i64: 1, 256>}, {transform_indices = @transform_3, window_bounds = array<i64: 16, 256>}]} {
    %c0_i32 = arith.constant 0 : i32
    %0 = arith.cmpi eq, %arg2, %c0_i32 : i32
    %1 = arith.extui %0 : i1 to i32
    %c0_i32_0 = arith.constant 0 : i32
    %2 = arith.cmpi ne, %1, %c0_i32_0 : i32
    scf.if %2 {
      %cst_10 = arith.constant 0.000000e+00 : f32
      %12 = vector.broadcast %cst_10 : f32 to vector<16x256xf32>
      %c0_11 = arith.constant 0 : index
      %c0_12 = arith.constant 0 : index
      %13 = vector.load %arg7[%c0_11, %c0_12] : memref<16x256xf32, #tpu.memory_space<vmem>>, vector<16x256xf32>
      tpu.vector_store %arg7[%c0_11, %c0_12], %12 {strides = array<i32>} : memref<16x256xf32, #tpu.memory_space<vmem>>, vector<16x256xf32>,
    } else {
    }
    %c0 = arith.constant 0 : index
    %c0_1 = arith.constant 0 : index
    %3 = vector.load %arg7[%c0, %c0_1] : memref<16x256xf32, #tpu.memory_space<vmem>>, vector<16x256xf32>
    %c0_2 = arith.constant 0 : index
    %c0_3 = arith.constant 0 : index
    %4 = vector.load %arg3[%c0_2, %c0_3] : memref<16x128xbf16, #tpu.memory_space<vmem>>, vector<16x128xbf16>
    %c0_4 = arith.constant 0 : index
    %c0_5 = arith.constant 0 : index
    %5 = vector.load %arg4[%c0_4, %c0_5] : memref<128x256xbf16, #tpu.memory_space<vmem>>, vector<128x256xbf16>
    %cst = arith.constant dense<0.000000e+00> : vector<16x256xf32>
    %6 = tpu.matmul %4, %5, %cst {dimension_numbers = #tpu.dot_dimension_numbers<[1], [0], [0], [1], [0, 0, 1, 1], [], []>} : vector<16x128xbf16>, vector<128x256xbf16>, vector<16x256xf32> -> vector<16x256xf32>
    %7 = arith.addf %3, %6 : vector<16x256xf32>
    %c0_6 = arith.constant 0 : index
    %c0_7 = arith.constant 0 : index
    %8 = vector.load %arg7[%c0_6, %c0_7] : memref<16x256xf32, #tpu.memory_space<vmem>>, vector<16x256xf32>
    tpu.vector_store %arg7[%c0_6, %c0_7], %7 {strides = array<i32>} : memref<16x256xf32, #tpu.memory_space<vmem>>, vector<16x256xf32>,
    %c0_i32_8 = arith.constant 0 : i32
    %9 = arith.cmpi eq, %arg2, %c0_i32_8 : i32
    %10 = arith.extui %9 : i1 to i32
    %c0_i32_9 = arith.constant 0 : i32
    %11 = arith.cmpi ne, %10, %c0_i32_9 : i32
    scf.if %11 {
      %c0_10 = arith.constant 0 : index
      %c0_11 = arith.constant 0 : index
      %12 = vector.load %arg7[%c0_10, %c0_11] : memref<16x256xf32, #tpu.memory_space<vmem>>, vector<16x256xf32>
      %c0_12 = arith.constant 0 : index
      %c0_13 = arith.constant 0 : index
      %13 = vector.load %arg5[%c0_12, %c0_13] : memref<1x256xf32, #tpu.memory_space<vmem>>, vector<1x256xf32>
      %14 = vector.broadcast %13 : vector<1x256xf32> to vector<16x256xf32>
      %15 = arith.addf %12, %14 : vector<16x256xf32>
      %16 = arith.truncf %15 : vector<16x256xf32> to vector<16x256xbf16>
      %c0_14 = arith.constant 0 : index
      %c0_15 = arith.constant 0 : index
      %17 = vector.load %arg6[%c0_14, %c0_15] : memref<16x256xbf16, #tpu.memory_space<vmem>>, vector<16x256xbf16>
      tpu.vector_store %arg6[%c0_14, %c0_15], %16 {strides = array<i32>} : memref<16x256xbf16, #tpu.memory_space<vmem>>, vector<16x256xbf16>,
    } else {
    }
    return
  }
  func.func @transform_0(%arg0: i32, %arg1: i32, %arg2: i32) -> (i32, i32) {
    %c0_i32 = arith.constant 0 : i32
    return %arg0, %arg2 : i32, i32
  }
  func.func @transform_1(%arg0: i32, %arg1: i32, %arg2: i32) -> (i32, i32) {
    %c0_i32 = arith.constant 0 : i32
    return %arg2, %arg1 : i32, i32
  }
  func.func @transform_2(%arg0: i32, %arg1: i32, %arg2: i32) -> (i32, i32) {
    %c0_i32 = arith.constant 0 : i32
    %c0_i32_0 = arith.constant 0 : i32
    return %c0_i32, %arg1 : i32, i32
  }
  func.func @transform_3(%arg0: i32, %arg1: i32, %arg2: i32) -> (i32, i32) {
    %c0_i32 = arith.constant 0 : i32
    return %arg0, %arg1 : i32, i32
  }
}

</mosaic_0001>

<llo_original>
// kernel: tpu_custom_call.1
$region0: #{tpu_custom_call.1}
  #allocation0 [shape = 'u32[]', space=smem, size = 0x4, offset = 0x4, fixed_abs, tag = 'smem constant byte address 0x4 - core index']
  #allocation1 [shape = 'u32[144,128]{1,0:T(1,128)}', space=vmem, size = 0x12000, scoped, tag = 'internal scratch']
  #allocation2 [shape = 'f32[16,256]{1,0:T(8,128)}', space=vmem, size = 0x4000, scoped, tag = 'scratch operand']
  %s0 = inlined_call_operand.hbm [shape: bf16[16,128], index: 0, kind: input, shape index: {}]
  %s1 = inlined_call_operand.hbm [shape: bf16[128,1536], index: 1, kind: input, shape index: {}]
  %s2 = inlined_call_operand.hbm [shape: f32[1,1536], index: 2, kind: input, shape index: {}]
  %s3 = inlined_call_operand.hbm [shape: bf16[16,1536], index: 3, kind: output, shape index: {}]
  %s4 = sld [smem:[#allocation0]]
  $region65: #{tpu_custom_call.1} parent=0
    _
  %s6 = ssub.s32 1, %s4
  %s7 = scalar_select 0, %s6, %s4
  $region1: #{tpu_custom_call.1} parent=0
    #allocation3 [shape = 'u8[4096]{0}', space=vmem, size = 0x1000, scoped, tag = 'input window, operand 0, single buffered']
    #allocation4 [shape = 's32[2]{0}', space=sflag, size = 0x8, scoped, tag = 'scoped memory for tpu_custom_call.1']
    #allocation5 [shape = 's32[2]{0}', space=sflag, size = 0x8, scoped, tag = 'scoped memory for tpu_custom_call.1']
    #allocation6 [shape = 'u8[131072]{0}', space=vmem, size = 0x20000, scoped, tag = 'input window, operand 1']
    #allocation7 [shape = 's32[2]{0}', space=sflag, size = 0x8, scoped, tag = 'scoped memory for tpu_custom_call.1']
    #allocation8 [shape = 'u8[2048]{0}', space=vmem, size = 0x800, scoped, tag = 'input window, operand 2']
    #allocation9 [shape = 'u8[16384]{0}', space=vmem, size = 0x4000, scoped, tag = 'output window, operand 0']
    %8 = vsyncpa [#allocation4], 0
    %9 = vsyncpa [#allocation7], 0
    %s10 = scalar_lea.sflag [#allocation7], 1
    %11 = vsyncpa %s10, 0
    %12 = vsyncpa [#allocation5], 0
    %s13 = scalar_lea.sflag [#allocation5], 1
    %14 = vsyncpa %s13, 0
    loop: start=0, step=1, limit=8
    $region2: #{tpu_custom_call.1} parent=1 // loop_pre_header
      _
    $region3: #{tpu_custom_call.1} parent=1 // loop_header
      %s16 = sphi 0, %s20
      %p17 = scmp.ge.s32.totalorder %s16, 8
      %s23 = sphi 0, %s42
      %s24 = sphi 0, %s38
      %s25 = sphi 0, %s34
      %s26 = sphi 0, %s23
      %s27 = sphi 0, %s24
      %s28 = sphi 0, %s25
      %s29 = sphi 0, %s26
      %s30 = sphi 0, %s27
      %s31 = sphi 0, %s28
      %s47 = sphi 0, %s49
      %s50 = sphi 0, %s47
      %s51 = sphi 0, %s50
      %s67 = sphi 0, %s51
      %s75 = sphi 0, %s77
      %s78 = sphi 0, %s75
      %s79 = sphi 0, %s78
      %s95 = sphi 0, %s79
      %s101 = sphi 0, %s103
      %s104 = sphi 0, %s101
      %s105 = sphi 0, %s104
      %s121 = sphi 0, %s105
      %s129 = sphi 0, %s131
      %s132 = sphi 0, %s129
      %s133 = sphi 0, %s132
      %s149 = sphi 0, %s133
    $region4: #{tpu_custom_call.1} parent=1 // loop_header_branch
      %19 = sbr.rel (%p17) target = $region8
    $region5: #{tpu_custom_call.1} parent=1 // loop_body
      %s21 = ssub.s32 %s16, 1
      %s22 = ssub.s32 %s16, 2
      %s32 = sadd.s32 1, %s25
      %p33 = scmp.ge.s32.totalorder %s32, 1
      %s34 = scalar_select %p33, 0, %s32
      %s35 = sadd.s32 1, %s24
      %s36 = scalar_select %p33, %s35, %s24
      %p37 = scmp.ge.s32.totalorder %s36, 6
      %s38 = scalar_select %p37, 0, %s36
      %s39 = sadd.s32 1, %s23
      %s40 = scalar_select %p37, %s39, %s23
      %p41 = scmp.ge.s32.totalorder %s40, 1
      %s42 = scalar_select %p41, 0, %s40
      %s43 = ssub.s32 %s23, %s42
      %s44 = ssub.s32 %s25, %s34
      %s45 = sor.u32 %s43, %s44
      %p46 = scmp.eq.s32.totalorder %s45, 0
      %s48 = sadd.s32 %s47, 1
      %s49 = scalar_select %p46, %s47, %s48
      %p52 = pneg %p46
      %p53 = scmp.eq.s32.totalorder %s16, 5
      %p54 = por %p52, %p53
      %p55 = scmp.ne.s32.totalorder %s47, %s50
      %p56 = scmp.eq.s32.totalorder %s16, 0
      %p57 = por %p55, %p56
      %p58 = scmp.ne.s32.totalorder %s47, %s50
      %p59 = scmp.eq.s32.totalorder %s21, 5
      %p60 = por %p58, %p59
      %p61 = scmp.ne.s32.totalorder %s50, %s51
      %p62 = scmp.eq.s32.totalorder %s21, 0
      %p63 = por %p61, %p62
      %p64 = scmp.ne.s32.totalorder %s50, %s51
      %p65 = scmp.eq.s32.totalorder %s22, 5
      %p66 = por %p64, %p65
      %p68 = scmp.ne.s32.totalorder %s51, %s67
      %p69 = scmp.eq.s32.totalorder %s22, 0
      %p70 = por %p68, %p69
      %s71 = ssub.s32 %s25, %s34
      %s72 = ssub.s32 %s24, %s38
      %s73 = sor.u32 %s71, %s72
      %p74 = scmp.eq.s32.totalorder %s73, 0
      %s76 = sadd.s32 %s75, 1
      %s77 = scalar_select %p74, %s75, %s76
      %p80 = pneg %p74
      %p81 = scmp.eq.s32.totalorder %s16, 5
      %p82 = por %p80, %p81
      %p83 = scmp.ne.s32.totalorder %s75, %s78
      %p84 = scmp.eq.s32.totalorder %s16, 0
      %p85 = por %p83, %p84
      %p86 = scmp.ne.s32.totalorder %s75, %s78
      %p87 = scmp.eq.s32.totalorder %s21, 5
      %p88 = por %p86, %p87
      %p89 = scmp.ne.s32.totalorder %s78, %s79
      %p90 = scmp.eq.s32.totalorder %s21, 0
      %p91 = por %p89, %p90
      %p92 = scmp.ne.s32.totalorder %s78, %s79
      %p93 = scmp.eq.s32.totalorder %s22, 5
      %p94 = por %p92, %p93
      %p96 = scmp.ne.s32.totalorder %s79, %s95
      %p97 = scmp.eq.s32.totalorder %s22, 0
      %p98 = por %p96, %p97
      %s99 = ssub.s32 %s24, %s38
      %p100 = scmp.eq.s32.totalorder %s99, 0
      %s102 = sadd.s32 %s101, 1
      %s103 = scalar_select %p100, %s101, %s102
      %p106 = pneg %p100
      %p107 = scmp.eq.s32.totalorder %s16, 5
      %p108 = por %p106, %p107
      %p109 = scmp.ne.s32.totalorder %s101, %s104
      %p110 = scmp.eq.s32.totalorder %s16, 0
      %p111 = por %p109, %p110
      %p112 = scmp.ne.s32.totalorder %s101, %s104
      %p113 = scmp.eq.s32.totalorder %s21, 5
      %p114 = por %p112, %p113
      %p115 = scmp.ne.s32.totalorder %s104, %s105
      %p116 = scmp.eq.s32.totalorder %s21, 0
      %p117 = por %p115, %p116
      %p118 = scmp.ne.s32.totalorder %s104, %s105
      %p119 = scmp.eq.s32.totalorder %s22, 5
      %p120 = por %p118, %p119
      %p122 = scmp.ne.s32.totalorder %s105, %s121
      %p123 = scmp.eq.s32.totalorder %s22, 0
      %p124 = por %p122, %p123
      %s125 = ssub.s32 %s23, %s42
      %s126 = ssub.s32 %s24, %s38
      %s127 = sor.u32 %s125, %s126
      %p128 = scmp.eq.s32.totalorder %s127, 0
      %s130 = sadd.s32 %s129, 1
      %s131 = scalar_select %p128, %s129, %s130
      %p134 = pneg %p128
      %p135 = scmp.eq.s32.totalorder %s16, 5
      %p136 = por %p134, %p135
      %p137 = scmp.ne.s32.totalorder %s129, %s132
      %p138 = scmp.eq.s32.totalorder %s16, 0
      %p139 = por %p137, %p138
      %p140 = scmp.ne.s32.totalorder %s129, %s132
      %p141 = scmp.eq.s32.totalorder %s21, 5
      %p142 = por %p140, %p141
      %p143 = scmp.ne.s32.totalorder %s132, %s133
      %p144 = scmp.eq.s32.totalorder %s21, 0
      %p145 = por %p143, %p144
      %p146 = scmp.ne.s32.totalorder %s132, %s133
      %p147 = scmp.eq.s32.totalorder %s22, 5
      %p148 = por %p146, %p147
      %p150 = scmp.ne.s32.totalorder %s133, %s149
      %p151 = scmp.eq.s32.totalorder %s22, 0
      %p152 = por %p150, %p151
      %p153 = scmp.le.s32.totalorder 1, %s16
      %p154 = scmp.lt.s32.totalorder %s16, 7
      %p155 = pnand %p153, %p154
      %p156 = pneg %p155
      // Predicated region
      $region9: #{tpu_custom_call.1} parent=5 // pred_check
        _
      $region10: #{tpu_custom_call.1} parent=5 // pred_check_branch
        %158 = sbr.rel (%p155) target = $region12
      $region11: #{tpu_custom_call.1} parent=5 // pred_region
        %s159 = ssub.s32 %s16, 1
        // Predicated region
        $region13: #{tpu_custom_call.1} parent=11 // pred_check
          %p160 = pneg %p63
        $region14: #{tpu_custom_call.1} parent=11 // pred_check_branch
          %162 = sbr.rel (%p160) target = $region16
        $region15: #{tpu_custom_call.1} parent=11 // pred_region
          %s163 = smul.u32 2, %s26
          %s165 = ssub.s32 128, 128
          %166 = vsyncadd [#allocation4], %s165
          %s167 = sadd.s32 %s28, %s163
          %s168 = smul.addr %s167, 64
          %s169 = scalar_lea.hbm %s0, %s168
          %s170 = sshll.u32 [#allocation3], 4
          %s171 = int_to_ptr.vmem [resolvable:$true] %s170
          %176 = dma.hbm_to_vmem [thread:$0]  %s169, 128, %s171, [#allocation4], 64, 64, 4
        $region16: #{tpu_custom_call.1} parent=11 // pred_fallthru
          _
      $region12: #{tpu_custom_call.1} parent=5 // pred_fallthru
        _
      %p177 = scmp.lt.s32.totalorder %s16, 6
      // Predicated region
      $region17: #{tpu_custom_call.1} parent=5 // pred_check
        %p178 = pneg %p177
      $region18: #{tpu_custom_call.1} parent=5 // pred_check_branch
        %180 = sbr.rel (%p178) target = $region20
      $region19: #{tpu_custom_call.1} parent=5 // pred_region
        // Predicated region
        $region21: #{tpu_custom_call.1} parent=19 // pred_check
          %p181 = pneg %p85
        $region22: #{tpu_custom_call.1} parent=19 // pred_check_branch
          %183 = sbr.rel (%p181) target = $region24
        $region23: #{tpu_custom_call.1} parent=19 // pred_region
          %s184 = sand.u32 %s16, 1
          %s185 = scalar_lea.sflag [#allocation7], %s184
          %s186 = sand.u32 %s75, 1
          %s187 = smul.addr %s186, 128
          %s188 = scalar_lea.vmem [#allocation6], %s187
          %s189 = smul.u32 16, %s25
          %s190 = smul.u32 2, %s24
          %s192 = ssub.s32 2048, 2048
          %193 = vsyncadd %s185, %s192
          %s194 = smul.addr %s189, 12
          %s195 = sadd.s32 %s190, %s194
          %s196 = smul.addr %s195, 64
          %s197 = scalar_lea.hbm %s1, %s196
          %s198 = sshll.u32 %s188, 4
          %s199 = int_to_ptr.vmem [resolvable:$true] %s198
          %204 = dma.hbm_to_vmem [thread:$0]  %s197, 2048, %s199, %s185, 768, 128, 8
        $region24: #{tpu_custom_call.1} parent=19 // pred_fallthru
          _
        // Predicated region
        $region25: #{tpu_custom_call.1} parent=19 // pred_check
          %p205 = pneg %p111
        $region26: #{tpu_custom_call.1} parent=19 // pred_check_branch
          %207 = sbr.rel (%p205) target = $region28
        $region27: #{tpu_custom_call.1} parent=19 // pred_region
          %s208 = sand.u32 %s16, 1
          %s209 = scalar_lea.sflag [#allocation7], %s208
          %s210 = sand.u32 %s101, 1
          %s211 = smul.addr %s210, 2
          %s212 = scalar_lea.vmem [#allocation8], %s211
          %s213 = smul.u32 2, %s24
          %s215 = ssub.s32 32, 32
          %216 = vsyncadd %s209, %s215
          %s217 = smul.addr %s213, 16
          %s218 = scalar_lea.hbm %s2, %s217
          %s220 = sshll.u32 %s212, 4
          %s221 = int_to_ptr.vmem [resolvable:$true] %s220
          %223 = dma.hbm_to_vmem [thread:$0]  %s218, 32, %s221, %s209
        $region28: #{tpu_custom_call.1} parent=19 // pred_fallthru
          _
      $region20: #{tpu_custom_call.1} parent=5 // pred_fallthru
        _
      %p224 = scmp.le.s32.totalorder 1, %s16
      %p225 = scmp.lt.s32.totalorder %s16, 7
      %p226 = pnand %p224, %p225
      %p227 = pneg %p226
      // Predicated region
      $region29: #{tpu_custom_call.1} parent=5 // pred_check
        _
      $region30: #{tpu_custom_call.1} parent=5 // pred_check_branch
        %229 = sbr.rel (%p226) target = $region32
      $region31: #{tpu_custom_call.1} parent=5 // pred_region
        %s230 = ssub.s32 %s16, 1
        // Predicated region
        $region33: #{tpu_custom_call.1} parent=31 // pred_check
          %p231 = pneg %p63
        $region34: #{tpu_custom_call.1} parent=31 // pred_check_branch
          %233 = sbr.rel (%p231) target = $region36
        $region35: #{tpu_custom_call.1} parent=31 // pred_region
          %234 = dma.done [#allocation4], 128
        $region36: #{tpu_custom_call.1} parent=31 // pred_fallthru
          _
        %s235 = sand.u32 %s21, 1
        %s236 = scalar_lea.sflag [#allocation7], %s235
        %s237 = sand.u32 %s78, 1
        %s238 = smul.addr %s237, 128
        %s239 = scalar_lea.vmem [#allocation6], %s238
        // Predicated region
        $region37: #{tpu_custom_call.1} parent=31 // pred_check
          %p240 = pneg %p91
        $region38: #{tpu_custom_call.1} parent=31 // pred_check_branch
          %242 = sbr.rel (%p240) target = $region40
        $region39: #{tpu_custom_call.1} parent=31 // pred_region
          %243 = dma.done %s236, 2048
        $region40: #{tpu_custom_call.1} parent=31 // pred_fallthru
          _
        %s244 = sand.u32 %s21, 1
        %s245 = scalar_lea.sflag [#allocation7], %s244
        %s246 = sand.u32 %s104, 1
        %s247 = smul.addr %s246, 2
        %s248 = scalar_lea.vmem [#allocation8], %s247
        // Predicated region
        $region41: #{tpu_custom_call.1} parent=31 // pred_check
          %p249 = pneg %p117
        $region42: #{tpu_custom_call.1} parent=31 // pred_check_branch
          %251 = sbr.rel (%p249) target = $region44
        $region43: #{tpu_custom_call.1} parent=31 // pred_region
          %252 = dma.done %s245, 32
        $region44: #{tpu_custom_call.1} parent=31 // pred_fallthru
          _
        %p253 = pneg %p63
        %p254 = pneg %p60
        %s255 = sand.u32 %s21, 1
        %s256 = scalar_lea.sflag [#allocation7], %s255
        %s257 = sand.u32 %s78, 1
        %s258 = smul.addr %s257, 128
        %s259 = scalar_lea.vmem [#allocation6], %s258
        %p260 = pneg %p91
        %p261 = pneg %p88
        %s262 = sand.u32 %s21, 1
        %s263 = scalar_lea.sflag [#allocation7], %s262
        %s264 = sand.u32 %s104, 1
        %s265 = smul.addr %s264, 2
        %s266 = scalar_lea.vmem [#allocation8], %s265
        %p267 = pneg %p117
        %p268 = pneg %p114
        %p269 = pneg %p145
        %p270 = pneg %p142
        %s271 = sand.u32 %s132, 1
        %s272 = scalar_lea.sflag [#allocation5], %s271
        %s273 = sand.u32 %s132, 1
        %s274 = smul.addr %s273, 16
        %s275 = scalar_lea.vmem [#allocation9], %s274
        %s276 = smul.u32 2, %s26
        %s277 = smul.u32 16, %s28
        %s278 = smul.u32 2, %s27
        %s279 = smul.u32 2, %s27
        %s280 = smul.u32 2, %s26
        %s281 = smul.u32 2, %s27
        %p283 = scmp.eq.s32.totalorder %s28, 0
        // Predicated region
        $region45: #{tpu_custom_call.1} parent=31 // pred_check
          %p284 = pneg %p283
        $region46: #{tpu_custom_call.1} parent=31 // pred_check_branch
          %286 = sbr.rel (%p284) target = $region48
        $region47: #{tpu_custom_call.1} parent=31 // pred_region
          %287 = vst [vmem:[#allocation2] sm:$0xff] 0.0
          %288 = vst [vmem:[#allocation2 + $0x8] sm:$0xff] 0.0
          %289 = vst [vmem:[#allocation2 + $0x10] sm:$0xff] 0.0
          %290 = vst [vmem:[#allocation2 + $0x18] sm:$0xff] 0.0
        $region48: #{tpu_custom_call.1} parent=31 // pred_fallthru
          _
        %v291 = vld [vmem:[#allocation2] sm:$0xff]
        %v292 = vld [vmem:[#allocation2 + $0x8] sm:$0xff]
        %v293 = vld [vmem:[#allocation2 + $0x10] sm:$0xff]
        %v294 = vld [vmem:[#allocation2 + $0x18] sm:$0xff]
        %v295 = vld [vmem:[#allocation3] sm:$0xf]
        %v296 = vld [vmem:[#allocation3 + $0x4] sm:$0xf]
        %v297 = vld [vmem:[%s239] sm:$0xff]
        %v298 = vld [vmem:[%s239 + $0x8] sm:$0xff]
        %v299 = vld [vmem:[%s239 + $0x10] sm:$0xff]
        %v300 = vld [vmem:[%s239 + $0x18] sm:$0xff]
        %v301 = vld [vmem:[%s239 + $0x20] sm:$0xff]
        %v302 = vld [vmem:[%s239 + $0x28] sm:$0xff]
        %v303 = vld [vmem:[%s239 + $0x30] sm:$0xff]
        %v304 = vld [vmem:[%s239 + $0x38] sm:$0xff]
        %v305 = vld [vmem:[%s239 + $0x40] sm:$0xff]
        %v306 = vld [vmem:[%s239 + $0x48] sm:$0xff]
        %v307 = vld [vmem:[%s239 + $0x50] sm:$0xff]
        %v308 = vld [vmem:[%s239 + $0x58] sm:$0xff]
        %v309 = vld [vmem:[%s239 + $0x60] sm:$0xff]
        %v310 = vld [vmem:[%s239 + $0x68] sm:$0xff]
        %v311 = vld [vmem:[%s239 + $0x70] sm:$0xff]
        %v312 = vld [vmem:[%s239 + $0x78] sm:$0xff]
        %v315 = vunpack.c.l.b16 %v295
        %v316 = vunpack.c.l.b16 %v296
        %v317 = vpack.c.b16 %v316, %v315
        %v335 = vunpack.c.l.b16 %v297
        %v336 = vunpack.c.h.b16 %v297
        %v337 = vunpack.c.l.b16 %v298
        %v338 = vunpack.c.h.b16 %v298
        %v339 = vunpack.c.l.b16 %v299
        %v340 = vunpack.c.h.b16 %v299
        %v341 = vunpack.c.l.b16 %v300
        %v342 = vunpack.c.h.b16 %v300
        %v343 = vunpack.c.l.b16 %v301
        %v344 = vunpack.c.h.b16 %v301
        %v345 = vunpack.c.l.b16 %v302
        %v346 = vunpack.c.h.b16 %v302
        %v347 = vunpack.c.l.b16 %v303
        %v348 = vunpack.c.h.b16 %v303
        %v349 = vunpack.c.l.b16 %v304
        %v350 = vunpack.c.h.b16 %v304
        %v351 = vunpack.c.l.b16 %v305
        %v352 = vunpack.c.h.b16 %v305
        %v353 = vunpack.c.l.b16 %v306
        %v354 = vunpack.c.h.b16 %v306
        %v355 = vunpack.c.l.b16 %v307
        %v356 = vunpack.c.h.b16 %v307
        %v357 = vunpack.c.l.b16 %v308
        %v358 = vunpack.c.h.b16 %v308
        %v359 = vunpack.c.l.b16 %v309
        %v360 = vunpack.c.h.b16 %v309
        %v361 = vunpack.c.l.b16 %v310
        %v362 = vunpack.c.h.b16 %v310
        %v363 = vunpack.c.l.b16 %v311
        %v364 = vunpack.c.h.b16 %v311
        %v365 = vunpack.c.l.b16 %v312
        %v366 = vunpack.c.h.b16 %v312
        %v367 = vpack.c.b16 %v337, %v335
        %v368 = vpack.c.b16 %v338, %v336
        %v369 = vpack.c.b16 %v341, %v339
        %v370 = vpack.c.b16 %v342, %v340
        %v371 = vpack.c.b16 %v345, %v343
        %v372 = vpack.c.b16 %v346, %v344
        %v373 = vpack.c.b16 %v349, %v347
        %v374 = vpack.c.b16 %v350, %v348
        %v375 = vpack.c.b16 %v353, %v351
        %v376 = vpack.c.b16 %v354, %v352
        %v377 = vpack.c.b16 %v357, %v355
        %v378 = vpack.c.b16 %v358, %v356
        %v379 = vpack.c.b16 %v361, %v359
        %v380 = vpack.c.b16 %v362, %v360
        %v381 = vpack.c.b16 %v365, %v363
        %v382 = vpack.c.b16 %v366, %v364
        %399 = vmatprep.subr.bf16.mxu0 %v382
        %400 = vmatpush1.bf16.msra.mxu0 %v381
        %401 = vmatprep.subr.bf16.mxu0 %v380
        %402 = vmatpush1.bf16.msra.mxu0 %v379
        %403 = vmatprep.subr.bf16.mxu0 %v378
        %404 = vmatpush1.bf16.msra.mxu0 %v377
        %405 = vmatprep.subr.bf16.mxu0 %v376
        %406 = vmatpush1.bf16.msra.mxu0 %v375
        %407 = vmatprep.subr.bf16.mxu0 %v374
        %408 = vmatpush1.bf16.msra.mxu0 %v373
        %409 = vmatprep.subr.bf16.mxu0 %v372
        %410 = vmatpush1.bf16.msra.mxu0 %v371
        %411 = vmatprep.subr.bf16.mxu0 %v370
        %412 = vmatpush1.bf16.msra.mxu0 %v369
        %413 = vmatprep.subr.bf16.mxu0 %v368
        %414 = vmatpush1.bf16.msra.mxu0 %v367
        %415 = vmatprep.subr.bf16.mxu0 0
        %416 = vmatpush2.bf16.msra.mxu0 0
        %417 = vmatprep.subr.bf16.mxu0 0
        %418 = vmatpush2.bf16.msra.mxu0 0
        %419 = vmatprep.subr.bf16.mxu0 0
        %420 = vmatpush2.bf16.msra.mxu0 0
        %421 = vmatprep.subr.bf16.mxu0 0
        %422 = vmatpush2.bf16.msra.mxu0 0
        %423 = vmatprep.subr.bf16.mxu0 0
        %424 = vmatpush2.bf16.msra.mxu0 0
        %425 = vmatprep.subr.bf16.mxu0 0
        %426 = vmatpush2.bf16.msra.mxu0 0
        %427 = vmatprep.subr.bf16.mxu0 0
        %428 = vmatpush2.bf16.msra.mxu0 0
        %429 = vmatprep.subr.bf16.mxu0 0
        %430 = vmatpush2.bf16.msra.mxu0 0
        %431 = vmatprep.mubr.bf16.mxu0 0
        %432 = vmatmul.mubr.bf16.gmra.mxu0 %v317
        %v433 = vpop.f32.mrf.mxu0
        %v434 = vadd.f32 0.0, %v433
        %v435 = vpop.f32.mrf.mxu0
        %v436 = vadd.f32 0.0, %v435
        %v437 = vpop.f32.mrf.mxu0
        %v438 = vadd.f32 0.0, %v437
        %v439 = vpop.f32.mrf.mxu0
        %v440 = vadd.f32 0.0, %v439
        %441 = vdwg.mxu0
        %v442 = vadd.f32 %v291, %v434
        %v443 = vadd.f32 %v292, %v436
        %v444 = vadd.f32 %v293, %v438
        %v445 = vadd.f32 %v294, %v440
        %446 = vst [vmem:[#allocation2] sm:$0xff] %v442
        %447 = vst [vmem:[#allocation2 + $0x8] sm:$0xff] %v443
        %448 = vst [vmem:[#allocation2 + $0x10] sm:$0xff] %v444
        %449 = vst [vmem:[#allocation2 + $0x18] sm:$0xff] %v445
        // Predicated region
        $region49: #{tpu_custom_call.1} parent=31 // pred_check
          %p450 = pneg %p283
        $region50: #{tpu_custom_call.1} parent=31 // pred_check_branch
          %452 = sbr.rel (%p450) target = $region52
        $region51: #{tpu_custom_call.1} parent=31 // pred_region
          %v453 = vld [vmem:[#allocation2] sm:$0xff]
          %v454 = vld [vmem:[#allocation2 + $0x8] sm:$0xff]
          %v455 = vld [vmem:[#allocation2 + $0x10] sm:$0xff]
          %v456 = vld [vmem:[#allocation2 + $0x18] sm:$0xff]
          %v457 = vld [vmem:[%s248] sm:$0x3]
          %v459 = vlaneseq
          %v460 = vshrl.u32 %v459, 7
          %v461 = vsub.s32 0, %v460
          %v462 = vrot.slane %v457, %v461
          %v463 = vlaneseq
          %v464 = vshrl.u32 %v463, 7
          %v465 = vsub.s32 1, %v464
          %v466 = vrot.slane %v457, %v465
          %v469 = vadd.f32 %v453, %v462
          %v470 = vadd.f32 %v454, %v466
          %v471 = vadd.f32 %v455, %v462
          %v472 = vadd.f32 %v456, %v466
          %v473 = vpack.c.bf16 %v471, %v469
          %v474 = vpack.c.bf16 %v472, %v470
          %v477 = vunpack.c.l.b16 %v473
          %v478 = vunpack.c.l.b16 %v474
          %v479 = vunpack.c.h.b16 %v473
          %v480 = vunpack.c.h.b16 %v474
          %v481 = vpack.c.b16 %v478, %v477
          %v482 = vpack.c.b16 %v480, %v479
          %485 = vst [vmem:[%s275] sm:$0xff] %v481
          %486 = vst [vmem:[%s275 + $0x8] sm:$0xff] %v482
        $region52: #{tpu_custom_call.1} parent=31 // pred_fallthru
          _
        %s487 = sand.u32 %s132, 1
        %s488 = scalar_lea.sflag [#allocation5], %s487
        %s489 = sand.u32 %s132, 1
        %s490 = smul.addr %s489, 16
        %s491 = scalar_lea.vmem [#allocation9], %s490
        // Predicated region
        $region53: #{tpu_custom_call.1} parent=31 // pred_check
          %p492 = pneg %p142
        $region54: #{tpu_custom_call.1} parent=31 // pred_check_branch
          %494 = sbr.rel (%p492) target = $region56
        $region55: #{tpu_custom_call.1} parent=31 // pred_region
          %s495 = smul.u32 2, %s26
          %s496 = smul.u32 2, %s27
          %s498 = ssub.s32 256, 256
          %499 = vsyncadd %s488, %s498
          %s500 = smul.addr %s495, 12
          %s501 = sadd.s32 %s496, %s500
          %s502 = smul.addr %s501, 64
          %s503 = scalar_lea.hbm %s3, %s502
          %s504 = sshll.u32 %s491, 4
          %s505 = int_to_ptr.vmem [resolvable:$true] %s504
          %510 = dma.vmem_to_hbm [thread:$0]  %s505, 256, %s503, %s488, 128, 768, 8
        $region56: #{tpu_custom_call.1} parent=31 // pred_fallthru
          _
      $region32: #{tpu_custom_call.1} parent=5 // pred_fallthru
        _
      %p511 = scmp.le.s32.totalorder 2, %s16
      // Predicated region
      $region57: #{tpu_custom_call.1} parent=5 // pred_check
        %p512 = pneg %p511
      $region58: #{tpu_custom_call.1} parent=5 // pred_check_branch
        %514 = sbr.rel (%p512) target = $region60
      $region59: #{tpu_custom_call.1} parent=5 // pred_region
        %s515 = ssub.s32 %s16, 2
        // Predicated region
        $region61: #{tpu_custom_call.1} parent=59 // pred_check
          %p516 = pneg %p148
        $region62: #{tpu_custom_call.1} parent=59 // pred_check_branch
          %518 = sbr.rel (%p516) target = $region64
        $region63: #{tpu_custom_call.1} parent=59 // pred_region
          %s519 = sand.u32 %s133, 1
          %s520 = scalar_lea.sflag [#allocation5], %s519
          %s521 = sand.u32 %s133, 1
          %s522 = smul.addr %s521, 16
          %s523 = scalar_lea.vmem [#allocation9], %s522
          %524 = dma.done %s520, 256
        $region64: #{tpu_custom_call.1} parent=59 // pred_fallthru
          _
      $region60: #{tpu_custom_call.1} parent=5 // pred_fallthru
        _
    $region6: #{tpu_custom_call.1} parent=1 // loop_footer
      %s20 = sadd.s32 1, %s16
    $region7: #{tpu_custom_call.1} parent=1 // loop_footer_branch
      %15 = sbr.rel target = $region3
    $region8: #{tpu_custom_call.1} parent=1 // loop_exit
      _
    %525 = vsyncpa [#allocation4], 1
    %s526 = scalar_lea.sflag [#allocation4], 1
    %527 = vsyncpa %s526, 1
    %528 = vsyncpa [#allocation7], 1
    %s529 = scalar_lea.sflag [#allocation7], 1
    %530 = vsyncpa %s529, 1
    %531 = vsyncpa [#allocation5], 1
    %s532 = scalar_lea.sflag [#allocation5], 1
    %533 = vsyncpa %s532, 1

</llo_original>
